<compile_context>
chip_gen: v7x
topology: tpu7x:2x2x1
jax: 0.10.0
libtpu: 0.0.40
codegen_flags: <defaults>
</compile_context>

<pallas_src>
import functools

import jax
import jax.numpy as jnp
from jax import lax
from jax.experimental import pallas as pl
from jax.experimental.pallas import tpu as pltpu


_INV_SQRT2 = 1.0 / 1.41421            # matches PyTorch f_gelu's erf(x / 1.41421)
_TANH_GELU_C = 0.7978845608028654     # sqrt(2/pi), used only when approx_gelu=True


def _transform_kernel(x_ref, w_ref, b_ref, gamma_ref, beta_ref, o_ref, *,
                      eps, matmul_dtype, approx_gelu):
    # x_ref:     [tm, H]  activation tile
    # w_ref:     [H, H]   weight, (in, out) layout, already cast to matmul_dtype
    # b_ref:     [1, H]   dense bias
    # gamma_ref: [1, H]   LayerNorm weight
    # beta_ref:  [1, H]   LayerNorm bias
    # o_ref:     [tm, H]
    x = x_ref[...]
    if matmul_dtype is not None:
        x = x.astype(matmul_dtype)   # feed the MXU in bf16; accumulation stays f32

    y = jnp.dot(x, w_ref[...], preferred_element_type=jnp.float32)
    y = y + b_ref[...].astype(jnp.float32)

    if approx_gelu:
        # Optional tanh-GELU: transcendental runs on the (nearly free) EUP slot.
        # NOTE: slightly different numerics than PyTorch's erf-based f_gelu.
        g = 0.5 * y * (1.0 + jnp.tanh(_TANH_GELU_C * (y + 0.044715 * (y * y * y))))
    else:
        # Exact f_gelu semantics; divide replaced by multiply with the
        # precomputed reciprocal (~1 ulp difference in the erf argument).
        g = y * 0.5 * (1.0 + lax.erf(y * _INV_SQRT2))

    # LayerNorm over the hidden dim (biased variance, eps=1e-12), fused here.
    mean = jnp.mean(g, axis=-1, keepdims=True)
    centered = g - mean
    var = jnp.mean(centered * centered, axis=-1, keepdims=True)
    norm = centered * lax.rsqrt(var + eps)
    out = norm * gamma_ref[...].astype(jnp.float32) + beta_ref[...].astype(jnp.float32)

    o_ref[...] = out.astype(o_ref.dtype)


def _launch(kernel, x, w_t, b2, g2, be2, *, tm, grid_m, H, out_dtype,
            vmem_limit_bytes, cost_estimate, conservative):
    """Build and run the pallas_call. `conservative=True` drops the newer
    features (pipeline_mode=Buffered(1), cost_estimate) as a safety fallback."""
    resident_kw = {} if conservative else dict(pipeline_mode=pl.Buffered(1))
    extra_kw = {} if conservative else dict(cost_estimate=cost_estimate)
    M = x.shape[0]
    return pl.pallas_call(
        kernel,
        out_shape=jax.ShapeDtypeStruct((M, H), out_dtype),
        grid=(grid_m,),
        in_specs=[
            pl.BlockSpec((tm, H), lambda i: (i, 0)),                  # activations (tiled)
            pl.BlockSpec((H, H), lambda i: (0, 0), **resident_kw),    # weight (resident)
            pl.BlockSpec((1, H), lambda i: (0, 0), **resident_kw),    # dense bias
            pl.BlockSpec((1, H), lambda i: (0, 0), **resident_kw),    # LN gamma
            pl.BlockSpec((1, H), lambda i: (0, 0), **resident_kw),    # LN beta
        ],
        out_specs=pl.BlockSpec((tm, H), lambda i: (i, 0)),
        compiler_params=pltpu.CompilerParams(
            dimension_semantics=("parallel",),      # rows shard across TCs (v7x)
            vmem_limit_bytes=vmem_limit_bytes,
        ),
        **extra_kw,
    )(x, w_t, b2, g2, be2)


def bert_prediction_head_transform(hidden_states, weight, bias, gamma, beta, *,
                                   eps=1e-12, block_rows=512,
                                   matmul_dtype=jnp.bfloat16,
                                   weight_transposed=False,
                                   approx_gelu=False,
                                   vmem_limit_bytes=None):
    """hidden_states: [..., H]; weight: [H, H] (out, in) unless weight_transposed;
    bias / gamma / beta: [H]."""
    orig_shape = hidden_states.shape
    H = orig_shape[-1]
    x = hidden_states.reshape(-1, H)
    M = x.shape[0]

    # Row tile: bf16 activations pack 2 rows per sublane -> multiple of 16; f32 -> 8.
    row_align = 16 if hidden_states.dtype == jnp.bfloat16 else 8
    if M <= row_align:
        tm = M                                   # full-extent block is always legal
    else:
        tm = max(row_align, (min(block_rows, M) // row_align) * row_align)
    grid_m = pl.cdiv(M, tm)                      # ragged tail masked by Pallas, no pad/slice

    # One-time layout plumbing. Prefer storing the weight pre-transposed at the
    # model level and passing weight_transposed=True so this never hits the
    # per-call critical path.
    w_t = weight if weight_transposed else weight.T          # (in, out)
    if matmul_dtype is not None:
        w_t = w_t.astype(matmul_dtype)
    b2 = bias.reshape(1, H)
    g2 = gamma.reshape(1, H)
    be2 = beta.reshape(1, H)

    x_bytes = x.dtype.itemsize
    w_bytes = w_t.dtype.itemsize
    if vmem_limit_bytes is None:
        est = (2 * tm * H * x_bytes      # double-buffered activation tiles in
               + 2 * tm * H * x_bytes    # double-buffered output tiles
               + 2 * H * H * w_bytes     # resident weight (worst case two buffers)
               + 8 * tm * H * 4)         # f32 body intermediates (rough)
        vmem_limit_bytes = int(min(max(int(est * 1.25), 32 << 20), 64 << 20))

    cost = pl.CostEstimate(
        flops=2 * M * H * H,
        transcendentals=M * H,
        bytes_accessed=2 * M * H * x_bytes + H * H * w_bytes,
    )

    kernel = functools.partial(_transform_kernel, eps=eps,
                               matmul_dtype=matmul_dtype, approx_gelu=approx_gelu)
    launch = functools.partial(_launch, kernel, x, w_t, b2, g2, be2,
                               tm=tm, grid_m=grid_m, H=H,
                               out_dtype=hidden_states.dtype,
                               vmem_limit_bytes=vmem_limit_bytes,
                               cost_estimate=cost)
    try:
        out = launch(conservative=False)
    except Exception:
        # Fallback if pipeline_mode=pl.Buffered(1) / cost_estimate is rejected
        # by this JAX version: default double buffering, same kernel.
        out = launch(conservative=True)

    return out.reshape(orig_shape)


if __name__ == "__main__":
    # Small shapes consistent with the module: batch=2, seq=8, hidden=256
    # (hidden a multiple of 128 for lane-dense tiles; real config is 768).
    B, S, H = 2, 8, 256

    key = jax.random.PRNGKey(0)
    k_x, k_w, k_b, k_g, k_be = jax.random.split(key, 5)

    hidden_states = jax.random.normal(k_x, (B, S, H), dtype=jnp.float32)
    weight = jax.random.normal(k_w, (H, H), dtype=jnp.float32) * 0.02   # (out, in)
    bias = jax.random.normal(k_b, (H,), dtype=jnp.float32) * 0.02
    gamma = 1.0 + 0.02 * jax.random.normal(k_g, (H,), dtype=jnp.float32)
    beta = 0.02 * jax.random.normal(k_be, (H,), dtype=jnp.float32)

    # block_rows=8 -> grid=(2,), exercising the pipelined / parallel path.
    out = bert_prediction_head_transform(hidden_states, weight, bias, gamma, beta,
                                         block_rows=8)
    out = jax.block_until_ready(out)
    assert out.shape == (B, S, H)

    # Reference matching the kernel's numerics (bf16 inputs to the matmul,
    # f32 accumulation, everything else f32).
    xb = hidden_states.astype(jnp.bfloat16).astype(jnp.float32)
    wb = weight.astype(jnp.bfloat16).astype(jnp.float32)
    y = xb @ wb.T + bias
    g = y * 0.5 * (1.0 + jax.scipy.special.erf(y / 1.41421))
    mean = g.mean(-1, keepdims=True)
    var = ((g - mean) ** 2).mean(-1, keepdims=True)
    ref = (g - mean) / jnp.sqrt(var + 1e-12) * gamma + beta
    err = float(jnp.max(jnp.abs(out - ref)))
    assert jnp.allclose(out, ref, atol=1e-3, rtol=1e-3), err

    # Loose sanity check against the pure-f32 PyTorch-equivalent forward
    # (deviation comes only from the bf16 matmul inputs).
    y32 = hidden_states @ weight.T + bias
    g32 = y32 * 0.5 * (1.0 + jax.scipy.special.erf(y32 / 1.41421))
    m32 = g32.mean(-1, keepdims=True)
    v32 = ((g32 - m32) ** 2).mean(-1, keepdims=True)
    ref32 = (g32 - m32) / jnp.sqrt(v32 + 1e-12) * gamma + beta
    err32 = float(jnp.max(jnp.abs(out - ref32)))
    assert jnp.allclose(out, ref32, atol=1e-1, rtol=1e-1), err32

    print("KERNEL_OK")
</pallas_src>

<mosaic_0001>
module attributes {stable_mosaic.version = 11 : i64} {
  func.func @_transform_kernel(%arg0: i32, %arg1: memref<8x256xf32, #tpu.memory_space<vmem>>, %arg2: memref<256x256xbf16, #tpu.memory_space<vmem>>, %arg3: memref<1x256xf32, #tpu.memory_space<vmem>>, %arg4: memref<1x256xf32, #tpu.memory_space<vmem>>, %arg5: memref<1x256xf32, #tpu.memory_space<vmem>>, %arg6: memref<8x256xf32, #tpu.memory_space<vmem>>) attributes {dimension_semantics = [#tpu.dimension_semantics<parallel>], iteration_bounds = array<i64: 2>, scalar_prefetch = 0 : i64, scratch_operands = 0 : i64, tpu.core_type = #tpu.core_type<tc>, window_params = [{transform_indices = @transform_0, window_bounds = array<i64: 8, 256>}, {pipeline_mode = #tpu.pipeline_mode<synchronous>, transform_indices = @transform_1, window_bounds = array<i64: 256, 256>}, {pipeline_mode = #tpu.pipeline_mode<synchronous>, transform_indices = @transform_2, window_bounds = array<i64: 1, 256>}, {pipeline_mode = #tpu.pipeline_mode<synchronous>, transform_indices = @transform_3, window_bounds = array<i64: 1, 256>}, {pipeline_mode = #tpu.pipeline_mode<synchronous>, transform_indices = @transform_4, window_bounds = array<i64: 1, 256>}, {transform_indices = @transform_5, window_bounds = array<i64: 8, 256>}]} {
    %c0 = arith.constant 0 : index
    %c0_0 = arith.constant 0 : index
    %0 = vector.load %arg1[%c0, %c0_0] : memref<8x256xf32, #tpu.memory_space<vmem>>, vector<8x256xf32>
    %1 = arith.truncf %0 : vector<8x256xf32> to vector<8x256xbf16>
    %c0_1 = arith.constant 0 : index
    %c0_2 = arith.constant 0 : index
    %2 = vector.load %arg2[%c0_1, %c0_2] : memref<256x256xbf16, #tpu.memory_space<vmem>>, vector<256x256xbf16>
    %cst = arith.constant dense<0.000000e+00> : vector<8x256xf32>
    %3 = tpu.matmul %1, %2, %cst {dimension_numbers = #tpu.dot_dimension_numbers<[1], [0], [0], [1], [0, 0, 1, 1], [], []>} : vector<8x256xbf16>, vector<256x256xbf16>, vector<8x256xf32> -> vector<8x256xf32>
    %c0_3 = arith.constant 0 : index
    %c0_4 = arith.constant 0 : index
    %4 = vector.load %arg3[%c0_3, %c0_4] : memref<1x256xf32, #tpu.memory_space<vmem>>, vector<1x256xf32>
    %5 = vector.broadcast %4 : vector<1x256xf32> to vector<8x256xf32>
    %6 = arith.addf %3, %5 : vector<8x256xf32>
    %cst_5 = arith.constant 5.000000e-01 : f32
    %7 = vector.broadcast %cst_5 : f32 to vector<8x256xf32>
    %8 = arith.mulf %6, %7 : vector<8x256xf32>
    %cst_6 = arith.constant 0.707108557 : f32
    %9 = vector.broadcast %cst_6 : f32 to vector<8x256xf32>
    %10 = arith.mulf %6, %9 : vector<8x256xf32>
    %11 = math.erf %10 : vector<8x256xf32>
    %cst_7 = arith.constant 1.000000e+00 : f32
    %12 = vector.broadcast %cst_7 : f32 to vector<8x256xf32>
    %13 = arith.addf %12, %11 : vector<8x256xf32>
    %14 = arith.mulf %8, %13 : vector<8x256xf32>
    %cst_8 = arith.constant dense<0.000000e+00> : vector<8xf32>
    %15 = vector.multi_reduction <add>, %14, %cst_8 [1] : vector<8x256xf32> to vector<8xf32>
    %16 = vector.shape_cast %15 : vector<8xf32> to vector<8x1xf32>
    %cst_9 = arith.constant 2.560000e+02 : f32
    %17 = vector.broadcast %cst_9 : f32 to vector<8x1xf32>
    %18 = arith.divf %16, %17 : vector<8x1xf32>
    %19 = vector.broadcast %18 : vector<8x1xf32> to vector<8x256xf32>
    %20 = arith.subf %14, %19 : vector<8x256xf32>
    %21 = arith.mulf %20, %20 : vector<8x256xf32>
    %cst_10 = arith.constant dense<0.000000e+00> : vector<8xf32>
    %22 = vector.multi_reduction <add>, %21, %cst_10 [1] : vector<8x256xf32> to vector<8xf32>
    %23 = vector.shape_cast %22 : vector<8xf32> to vector<8x1xf32>
    %cst_11 = arith.constant 2.560000e+02 : f32
    %24 = vector.broadcast %cst_11 : f32 to vector<8x1xf32>
    %25 = arith.divf %23, %24 : vector<8x1xf32>
    %cst_12 = arith.constant 9.99999996E-13 : f32
    %26 = vector.broadcast %cst_12 : f32 to vector<8x1xf32>
    %27 = arith.addf %25, %26 : vector<8x1xf32>
    %28 = math.rsqrt %27 : vector<8x1xf32>
    %29 = vector.broadcast %28 : vector<8x1xf32> to vector<8x256xf32>
    %30 = arith.mulf %20, %29 : vector<8x256xf32>
    %c0_13 = arith.constant 0 : index
    %c0_14 = arith.constant 0 : index
    %31 = vector.load %arg4[%c0_13, %c0_14] : memref<1x256xf32, #tpu.memory_space<vmem>>, vector<1x256xf32>
    %32 = vector.broadcast %31 : vector<1x256xf32> to vector<8x256xf32>
    %33 = arith.mulf %30, %32 : vector<8x256xf32>
    %c0_15 = arith.constant 0 : index
    %c0_16 = arith.constant 0 : index
    %34 = vector.load %arg5[%c0_15, %c0_16] : memref<1x256xf32, #tpu.memory_space<vmem>>, vector<1x256xf32>
    %35 = vector.broadcast %34 : vector<1x256xf32> to vector<8x256xf32>
    %36 = arith.addf %33, %35 : vector<8x256xf32>
    %c0_17 = arith.constant 0 : index
    %c0_18 = arith.constant 0 : index
    %37 = vector.load %arg6[%c0_17, %c0_18] : memref<8x256xf32, #tpu.memory_space<vmem>>, vector<8x256xf32>
    tpu.vector_store %arg6[%c0_17, %c0_18], %36 {strides = array<i32>} : memref<8x256xf32, #tpu.memory_space<vmem>>, vector<8x256xf32>,
    return
  }
  func.func @transform_0(%arg0: i32) -> (i32, i32) {
    %c0_i32 = arith.constant 0 : i32
    %c0_i32_0 = arith.constant 0 : i32
    return %arg0, %c0_i32 : i32, i32
  }
  func.func @transform_1(%arg0: i32) -> (i32, i32) {
    %c0_i32 = arith.constant 0 : i32
    %c0_i32_0 = arith.constant 0 : i32
    %c0_i32_1 = arith.constant 0 : i32
    return %c0_i32, %c0_i32_0 : i32, i32
  }
  func.func @transform_2(%arg0: i32) -> (i32, i32) {
    %c0_i32 = arith.constant 0 : i32
    %c0_i32_0 = arith.constant 0 : i32
    %c0_i32_1 = arith.constant 0 : i32
    return %c0_i32, %c0_i32_0 : i32, i32
  }
  func.func @transform_3(%arg0: i32) -> (i32, i32) {
    %c0_i32 = arith.constant 0 : i32
    %c0_i32_0 = arith.constant 0 : i32
    %c0_i32_1 = arith.constant 0 : i32
    return %c0_i32, %c0_i32_0 : i32, i32
  }
  func.func @transform_4(%arg0: i32) -> (i32, i32) {
    %c0_i32 = arith.constant 0 : i32
    %c0_i32_0 = arith.constant 0 : i32
    %c0_i32_1 = arith.constant 0 : i32
    return %c0_i32, %c0_i32_0 : i32, i32
  }
  func.func @transform_5(%arg0: i32) -> (i32, i32) {
    %c0_i32 = arith.constant 0 : i32
    %c0_i32_0 = arith.constant 0 : i32
    return %arg0, %c0_i32 : i32, i32
  }
}

module attributes {stable_mosaic.version = 11 : i64} {
  func.func @_transform_kernel(%arg0: i32, %arg1: memref<8x256xf32, #tpu.memory_space<vmem>>, %arg2: memref<256x256xbf16, #tpu.memory_space<vmem>>, %arg3: memref<1x256xf32, #tpu.memory_space<vmem>>, %arg4: memref<1x256xf32, #tpu.memory_space<vmem>>, %arg5: memref<1x256xf32, #tpu.memory_space<vmem>>, %arg6: memref<8x256xf32, #tpu.memory_space<vmem>>) attributes {dimension_semantics = [#tpu.dimension_semantics<parallel>], iteration_bounds = array<i64: 2>, scalar_prefetch = 0 : i64, scratch_operands = 0 : i64, tpu.core_type = #tpu.core_type<tc>, window_params = [{transform_indices = @transform_0, window_bounds = array<i64: 8, 256>}, {pipeline_mode = #tpu.pipeline_mode<synchronous>, transform_indices = @transform_1, window_bounds = array<i64: 256, 256>}, {pipeline_mode = #tpu.pipeline_mode<synchronous>, transform_indices = @transform_2, window_bounds = array<i64: 1, 256>}, {pipeline_mode = #tpu.pipeline_mode<synchronous>, transform_indices = @transform_3, window_bounds = array<i64: 1, 256>}, {pipeline_mode = #tpu.pipeline_mode<synchronous>, transform_indices = @transform_4, window_bounds = array<i64: 1, 256>}, {transform_indices = @transform_5, window_bounds = array<i64: 8, 256>}]} {
    %c0 = arith.constant 0 : index
    %c0_0 = arith.constant 0 : index
    %0 = vector.load %arg1[%c0, %c0_0] : memref<8x256xf32, #tpu.memory_space<vmem>>, vector<8x256xf32>
    %1 = arith.truncf %0 : vector<8x256xf32> to vector<8x256xbf16>
    %c0_1 = arith.constant 0 : index
    %c0_2 = arith.constant 0 : index
    %2 = vector.load %arg2[%c0_1, %c0_2] : memref<256x256xbf16, #tpu.memory_space<vmem>>, vector<256x256xbf16>
    %cst = arith.constant dense<0.000000e+00> : vector<8x256xf32>
    %3 = tpu.matmul %1, %2, %cst {dimension_numbers = #tpu.dot_dimension_numbers<[1], [0], [0], [1], [0, 0, 1, 1], [], []>} : vector<8x256xbf16>, vector<256x256xbf16>, vector<8x256xf32> -> vector<8x256xf32>
    %c0_3 = arith.constant 0 : index
    %c0_4 = arith.constant 0 : index
    %4 = vector.load %arg3[%c0_3, %c0_4] : memref<1x256xf32, #tpu.memory_space<vmem>>, vector<1x256xf32>
    %5 = vector.broadcast %4 : vector<1x256xf32> to vector<8x256xf32>
    %6 = arith.addf %3, %5 : vector<8x256xf32>
    %cst_5 = arith.constant 5.000000e-01 : f32
    %7 = vector.broadcast %cst_5 : f32 to vector<8x256xf32>
    %8 = arith.mulf %6, %7 : vector<8x256xf32>
    %cst_6 = arith.constant 0.707108557 : f32
    %9 = vector.broadcast %cst_6 : f32 to vector<8x256xf32>
    %10 = arith.mulf %6, %9 : vector<8x256xf32>
    %11 = math.erf %10 : vector<8x256xf32>
    %cst_7 = arith.constant 1.000000e+00 : f32
    %12 = vector.broadcast %cst_7 : f32 to vector<8x256xf32>
    %13 = arith.addf %12, %11 : vector<8x256xf32>
    %14 = arith.mulf %8, %13 : vector<8x256xf32>
    %cst_8 = arith.constant dense<0.000000e+00> : vector<8xf32>
    %15 = vector.multi_reduction <add>, %14, %cst_8 [1] : vector<8x256xf32> to vector<8xf32>
    %16 = vector.shape_cast %15 : vector<8xf32> to vector<8x1xf32>
    %cst_9 = arith.constant 2.560000e+02 : f32
    %17 = vector.broadcast %cst_9 : f32 to vector<8x1xf32>
    %18 = arith.divf %16, %17 : vector<8x1xf32>
    %19 = vector.broadcast %18 : vector<8x1xf32> to vector<8x256xf32>
    %20 = arith.subf %14, %19 : vector<8x256xf32>
    %21 = arith.mulf %20, %20 : vector<8x256xf32>
    %cst_10 = arith.constant dense<0.000000e+00> : vector<8xf32>
    %22 = vector.multi_reduction <add>, %21, %cst_10 [1] : vector<8x256xf32> to vector<8xf32>
    %23 = vector.shape_cast %22 : vector<8xf32> to vector<8x1xf32>
    %cst_11 = arith.constant 2.560000e+02 : f32
    %24 = vector.broadcast %cst_11 : f32 to vector<8x1xf32>
    %25 = arith.divf %23, %24 : vector<8x1xf32>
    %cst_12 = arith.constant 9.99999996E-13 : f32
    %26 = vector.broadcast %cst_12 : f32 to vector<8x1xf32>
    %27 = arith.addf %25, %26 : vector<8x1xf32>
    %28 = math.rsqrt %27 : vector<8x1xf32>
    %29 = vector.broadcast %28 : vector<8x1xf32> to vector<8x256xf32>
    %30 = arith.mulf %20, %29 : vector<8x256xf32>
    %c0_13 = arith.constant 0 : index
    %c0_14 = arith.constant 0 : index
    %31 = vector.load %arg4[%c0_13, %c0_14] : memref<1x256xf32, #tpu.memory_space<vmem>>, vector<1x256xf32>
    %32 = vector.broadcast %31 : vector<1x256xf32> to vector<8x256xf32>
    %33 = arith.mulf %30, %32 : vector<8x256xf32>
    %c0_15 = arith.constant 0 : index
    %c0_16 = arith.constant 0 : index
    %34 = vector.load %arg5[%c0_15, %c0_16] : memref<1x256xf32, #tpu.memory_space<vmem>>, vector<1x256xf32>
    %35 = vector.broadcast %34 : vector<1x256xf32> to vector<8x256xf32>
    %36 = arith.addf %33, %35 : vector<8x256xf32>
    %c0_17 = arith.constant 0 : index
    %c0_18 = arith.constant 0 : index
    %37 = vector.load %arg6[%c0_17, %c0_18] : memref<8x256xf32, #tpu.memory_space<vmem>>, vector<8x256xf32>
    tpu.vector_store %arg6[%c0_17, %c0_18], %36 {strides = array<i32>} : memref<8x256xf32, #tpu.memory_space<vmem>>, vector<8x256xf32>,
    return
  }
  func.func @transform_0(%arg0: i32) -> (i32, i32) {
    %c0_i32 = arith.constant 0 : i32
    %c0_i32_0 = arith.constant 0 : i32
    return %arg0, %c0_i32 : i32, i32
  }
  func.func @transform_1(%arg0: i32) -> (i32, i32) {
    %c0_i32 = arith.constant 0 : i32
    %c0_i32_0 = arith.constant 0 : i32
    %c0_i32_1 = arith.constant 0 : i32
    return %c0_i32, %c0_i32_0 : i32, i32
  }
  func.func @transform_2(%arg0: i32) -> (i32, i32) {
    %c0_i32 = arith.constant 0 : i32
    %c0_i32_0 = arith.constant 0 : i32
    %c0_i32_1 = arith.constant 0 : i32
    return %c0_i32, %c0_i32_0 : i32, i32
  }
  func.func @transform_3(%arg0: i32) -> (i32, i32) {
    %c0_i32 = arith.constant 0 : i32
    %c0_i32_0 = arith.constant 0 : i32
    %c0_i32_1 = arith.constant 0 : i32
    return %c0_i32, %c0_i32_0 : i32, i32
  }
  func.func @transform_4(%arg0: i32) -> (i32, i32) {
    %c0_i32 = arith.constant 0 : i32
    %c0_i32_0 = arith.constant 0 : i32
    %c0_i32_1 = arith.constant 0 : i32
    return %c0_i32, %c0_i32_0 : i32, i32
  }
  func.func @transform_5(%arg0: i32) -> (i32, i32) {
    %c0_i32 = arith.constant 0 : i32
    %c0_i32_0 = arith.constant 0 : i32
    return %arg0, %c0_i32 : i32, i32
  }
}

</mosaic_0001>

<llo_original>
// kernel: tpu_custom_call.1
$region0: #{tpu_custom_call.1}
  #allocation0 [shape = 'u32[]', space=smem, size = 0x4, offset = 0x4, fixed_abs, tag = 'smem constant byte address 0x4 - core index']
  #allocation1 [shape = 'u32[144,128]{1,0:T(1,128)}', space=vmem, size = 0x12000, scoped, tag = 'internal scratch']
  %s0 = inlined_call_operand.hbm [shape: f32[16,256], index: 0, kind: input, shape index: {}]
  %s1 = inlined_call_operand.hbm [shape: bf16[256,256], index: 1, kind: input, shape index: {}]
  %s2 = inlined_call_operand.vmem [shape: f32[1,256], index: 2, kind: input, shape index: {}]
  %s3 = inlined_call_operand.vmem [shape: f32[1,256], index: 3, kind: input, shape index: {}]
  %s4 = inlined_call_operand.vmem [shape: f32[1,256], index: 4, kind: input, shape index: {}]
  %s5 = inlined_call_operand.hbm [shape: f32[16,256], index: 5, kind: output, shape index: {}]
  %s6 = sld [smem:[#allocation0]]
  $region61: #{tpu_custom_call.1} parent=0
    _
  %s8 = ssub.s32 1, %s6
  %s9 = scalar_select 0, %s8, %s6
  $region1: #{tpu_custom_call.1} parent=0
    #allocation2 [shape = 'u8[16384]{0}', space=vmem, size = 0x4000, scoped, tag = 'input window, operand 0']
    #allocation3 [shape = 's32[2]{0}', space=sflag, size = 0x8, scoped, tag = 'scoped memory for tpu_custom_call.1']
    #allocation4 [shape = 's32[2]{0}', space=sflag, size = 0x8, scoped, tag = 'scoped memory for tpu_custom_call.1']
    #allocation5 [shape = 'u8[131072]{0}', space=vmem, size = 0x20000, scoped, tag = 'input window, operand 1, single buffered']
    #allocation6 [shape = 's32[1]{0}', space=sflag, size = 0x4, scoped, tag = 'scoped memory for tpu_custom_call.1']
    #allocation7 [shape = 'u8[16384]{0}', space=vmem, size = 0x4000, scoped, tag = 'output window, operand 0']
    %10 = vsyncpa [#allocation3], 0
    %s11 = scalar_lea.sflag [#allocation3], 1
    %12 = vsyncpa %s11, 0
    %13 = vsyncpa [#allocation6], 0
    %14 = vsyncpa [#allocation4], 0
    %s15 = scalar_lea.sflag [#allocation4], 1
    %16 = vsyncpa %s15, 0
    loop: start=0, step=1, limit=4
    $region2: #{tpu_custom_call.1} parent=1 // loop_pre_header
      _
    $region3: #{tpu_custom_call.1} parent=1 // loop_header
      %s18 = sphi 0, %s22
      %p19 = scmp.ge.s32.totalorder %s18, 4
      %s28 = sphi 0, %s30
      %s31 = sphi 0, %s28
      %s32 = sphi 0, %s31
      %s48 = sphi 0, %s32
      %s52 = sphi 0, %s52
      %s54 = sphi 0, %s52
      %s55 = sphi 0, %s54
      %s69 = sphi 0, %s55
      %s73 = sphi 0, %s73
      %s75 = sphi 0, %s73
      %s76 = sphi 0, %s75
      %s90 = sphi 0, %s76
      %s94 = sphi 0, %s94
      %s96 = sphi 0, %s94
      %s97 = sphi 0, %s96
      %s111 = sphi 0, %s97
      %s115 = sphi 0, %s115
      %s117 = sphi 0, %s115
      %s118 = sphi 0, %s117
      %s132 = sphi 0, %s118
      %s138 = sphi 0, %s140
      %s141 = sphi 0, %s138
      %s142 = sphi 0, %s141
      %s158 = sphi 0, %s142
    $region4: #{tpu_custom_call.1} parent=1 // loop_header_branch
      %21 = sbr.rel (%p19) target = $region8
    $region5: #{tpu_custom_call.1} parent=1 // loop_body
      %s23 = ssub.s32 %s18, 1
      %s24 = ssub.s32 %s18, 2
      %s25 = sadd.s32 %s18, 1
      %s26 = ssub.s32 %s18, %s25
      %p27 = scmp.eq.s32.totalorder %s26, 0
      %s29 = sadd.s32 %s28, 1
      %s30 = scalar_select %p27, %s28, %s29
      %p33 = pneg %p27
      %p34 = scmp.eq.s32.totalorder %s18, 1
      %p35 = por %p33, %p34
      %p36 = scmp.ne.s32.totalorder %s28, %s31
      %p37 = scmp.eq.s32.totalorder %s18, 0
      %p38 = por %p36, %p37
      %p39 = scmp.ne.s32.totalorder %s28, %s31
      %p40 = scmp.eq.s32.totalorder %s23, 1
      %p41 = por %p39, %p40
      %p42 = scmp.ne.s32.totalorder %s31, %s32
      %p43 = scmp.eq.s32.totalorder %s23, 0
      %p44 = por %p42, %p43
      %p45 = scmp.ne.s32.totalorder %s31, %s32
      %p46 = scmp.eq.s32.totalorder %s24, 1
      %p47 = por %p45, %p46
      %p49 = scmp.ne.s32.totalorder %s32, %s48
      %p50 = scmp.eq.s32.totalorder %s24, 0
      %p51 = por %p49, %p50
      %s53 = sadd.s32 %s52, 1
      %p56 = scmp.eq.s32.totalorder %s18, 1
      %p57 = scmp.ne.s32.totalorder %s52, %s54
      %p58 = scmp.eq.s32.totalorder %s18, 0
      %p59 = por %p57, %p58
      %p60 = scmp.ne.s32.totalorder %s52, %s54
      %p61 = scmp.eq.s32.totalorder %s23, 1
      %p62 = por %p60, %p61
      %p63 = scmp.ne.s32.totalorder %s54, %s55
      %p64 = scmp.eq.s32.totalorder %s23, 0
      %p65 = por %p63, %p64
      %p66 = scmp.ne.s32.totalorder %s54, %s55
      %p67 = scmp.eq.s32.totalorder %s24, 1
      %p68 = por %p66, %p67
      %p70 = scmp.ne.s32.totalorder %s55, %s69
      %p71 = scmp.eq.s32.totalorder %s24, 0
      %p72 = por %p70, %p71
      %s74 = sadd.s32 %s73, 1
      %p77 = scmp.eq.s32.totalorder %s18, 1
      %p78 = scmp.ne.s32.totalorder %s73, %s75
      %p79 = scmp.eq.s32.totalorder %s18, 0
      %p80 = por %p78, %p79
      %p81 = scmp.ne.s32.totalorder %s73, %s75
      %p82 = scmp.eq.s32.totalorder %s23, 1
      %p83 = por %p81, %p82
      %p84 = scmp.ne.s32.totalorder %s75, %s76
      %p85 = scmp.eq.s32.totalorder %s23, 0
      %p86 = por %p84, %p85
      %p87 = scmp.ne.s32.totalorder %s75, %s76
      %p88 = scmp.eq.s32.totalorder %s24, 1
      %p89 = por %p87, %p88
      %p91 = scmp.ne.s32.totalorder %s76, %s90
      %p92 = scmp.eq.s32.totalorder %s24, 0
      %p93 = por %p91, %p92
      %s95 = sadd.s32 %s94, 1
      %p98 = scmp.eq.s32.totalorder %s18, 1
      %p99 = scmp.ne.s32.totalorder %s94, %s96
      %p100 = scmp.eq.s32.totalorder %s18, 0
      %p101 = por %p99, %p100
      %p102 = scmp.ne.s32.totalorder %s94, %s96
      %p103 = scmp.eq.s32.totalorder %s23, 1
      %p104 = por %p102, %p103
      %p105 = scmp.ne.s32.totalorder %s96, %s97
      %p106 = scmp.eq.s32.totalorder %s23, 0
      %p107 = por %p105, %p106
      %p108 = scmp.ne.s32.totalorder %s96, %s97
      %p109 = scmp.eq.s32.totalorder %s24, 1
      %p110 = por %p108, %p109
      %p112 = scmp.ne.s32.totalorder %s97, %s111
      %p113 = scmp.eq.s32.totalorder %s24, 0
      %p114 = por %p112, %p113
      %s116 = sadd.s32 %s115, 1
      %p119 = scmp.eq.s32.totalorder %s18, 1
      %p120 = scmp.ne.s32.totalorder %s115, %s117
      %p121 = scmp.eq.s32.totalorder %s18, 0
      %p122 = por %p120, %p121
      %p123 = scmp.ne.s32.totalorder %s115, %s117
      %p124 = scmp.eq.s32.totalorder %s23, 1
      %p125 = por %p123, %p124
      %p126 = scmp.ne.s32.totalorder %s117, %s118
      %p127 = scmp.eq.s32.totalorder %s23, 0
      %p128 = por %p126, %p127
      %p129 = scmp.ne.s32.totalorder %s117, %s118
      %p130 = scmp.eq.s32.totalorder %s24, 1
      %p131 = por %p129, %p130
      %p133 = scmp.ne.s32.totalorder %s118, %s132
      %p134 = scmp.eq.s32.totalorder %s24, 0
      %p135 = por %p133, %p134
      %s136 = ssub.s32 %s18, %s25
      %p137 = scmp.eq.s32.totalorder %s136, 0
      %s139 = sadd.s32 %s138, 1
      %s140 = scalar_select %p137, %s138, %s139
      %p143 = pneg %p137
      %p144 = scmp.eq.s32.totalorder %s18, 1
      %p145 = por %p143, %p144
      %p146 = scmp.ne.s32.totalorder %s138, %s141
      %p147 = scmp.eq.s32.totalorder %s18, 0
      %p148 = por %p146, %p147
      %p149 = scmp.ne.s32.totalorder %s138, %s141
      %p150 = scmp.eq.s32.totalorder %s23, 1
      %p151 = por %p149, %p150
      %p152 = scmp.ne.s32.totalorder %s141, %s142
      %p153 = scmp.eq.s32.totalorder %s23, 0
      %p154 = por %p152, %p153
      %p155 = scmp.ne.s32.totalorder %s141, %s142
      %p156 = scmp.eq.s32.totalorder %s24, 1
      %p157 = por %p155, %p156
      %p159 = scmp.ne.s32.totalorder %s142, %s158
      %p160 = scmp.eq.s32.totalorder %s24, 0
      %p161 = por %p159, %p160
      %p162 = scmp.le.s32.totalorder 1, %s18
      %p163 = scmp.lt.s32.totalorder %s18, 3
      %p164 = pnand %p162, %p163
      %p165 = pneg %p164
      // Predicated region
      $region9: #{tpu_custom_call.1} parent=5 // pred_check
        _
      $region10: #{tpu_custom_call.1} parent=5 // pred_check_branch
        %167 = sbr.rel (%p164) target = $region12
      $region11: #{tpu_custom_call.1} parent=5 // pred_region
        %s168 = ssub.s32 %s18, 1
        // Predicated region
        $region13: #{tpu_custom_call.1} parent=11 // pred_check
          %p169 = pneg %p65
        $region14: #{tpu_custom_call.1} parent=11 // pred_check_branch
          %171 = sbr.rel (%p169) target = $region16
        $region15: #{tpu_custom_call.1} parent=11 // pred_region
          %s173 = ssub.s32 4096, 4096
          %174 = vsyncadd [#allocation6], %s173
          %s175 = sshll.u32 [#allocation5], 4
          %s176 = int_to_ptr.vmem [resolvable:$true] %s175
          %181 = dma.hbm_to_vmem [thread:$0]  %s1, 4096, %s176, [#allocation6], 128, 128, 8
        $region16: #{tpu_custom_call.1} parent=11 // pred_fallthru
          _
        // Predicated region
        $region17: #{tpu_custom_call.1} parent=11 // pred_check
          %p182 = pneg %p86
        $region18: #{tpu_custom_call.1} parent=11 // pred_check_branch
          %184 = sbr.rel (%p182) target = $region20
        $region19: #{tpu_custom_call.1} parent=11 // pred_region
          _
        $region20: #{tpu_custom_call.1} parent=11 // pred_fallthru
          _
        // Predicated region
        $region21: #{tpu_custom_call.1} parent=11 // pred_check
          %p185 = pneg %p107
        $region22: #{tpu_custom_call.1} parent=11 // pred_check_branch
          %187 = sbr.rel (%p185) target = $region24
        $region23: #{tpu_custom_call.1} parent=11 // pred_region
          _
        $region24: #{tpu_custom_call.1} parent=11 // pred_fallthru
          _
        // Predicated region
        $region25: #{tpu_custom_call.1} parent=11 // pred_check
          %p188 = pneg %p128
        $region26: #{tpu_custom_call.1} parent=11 // pred_check_branch
          %190 = sbr.rel (%p188) target = $region28
        $region27: #{tpu_custom_call.1} parent=11 // pred_region
          _
        $region28: #{tpu_custom_call.1} parent=11 // pred_fallthru
          _
      $region12: #{tpu_custom_call.1} parent=5 // pred_fallthru
        _
      %p191 = scmp.lt.s32.totalorder %s18, 2
      // Predicated region
      $region29: #{tpu_custom_call.1} parent=5 // pred_check
        %p192 = pneg %p191
      $region30: #{tpu_custom_call.1} parent=5 // pred_check_branch
        %194 = sbr.rel (%p192) target = $region32
      $region31: #{tpu_custom_call.1} parent=5 // pred_region
        // Predicated region
        $region33: #{tpu_custom_call.1} parent=31 // pred_check
          %p195 = pneg %p38
        $region34: #{tpu_custom_call.1} parent=31 // pred_check_branch
          %197 = sbr.rel (%p195) target = $region36
        $region35: #{tpu_custom_call.1} parent=31 // pred_region
          %s198 = sand.u32 %s28, 1
          %s199 = scalar_lea.sflag [#allocation3], %s198
          %s200 = sand.u32 %s28, 1
          %s201 = smul.addr %s200, 16
          %s202 = scalar_lea.vmem [#allocation2], %s201
          %s204 = ssub.s32 256, 256
          %205 = vsyncadd %s199, %s204
          %s206 = smul.addr %s18, 2
          %s207 = smul.addr %s206, 128
          %s208 = scalar_lea.hbm %s0, %s207
          %s210 = sshll.u32 %s202, 4
          %s211 = int_to_ptr.vmem [resolvable:$true] %s210
          %213 = dma.hbm_to_vmem [thread:$0]  %s208, 256, %s211, %s199
        $region36: #{tpu_custom_call.1} parent=31 // pred_fallthru
          _
      $region32: #{tpu_custom_call.1} parent=5 // pred_fallthru
        _
      %p214 = scmp.le.s32.totalorder 1, %s18
      %p215 = scmp.lt.s32.totalorder %s18, 3
      %p216 = pnand %p214, %p215
      %p217 = pneg %p216
      // Predicated region
      $region37: #{tpu_custom_call.1} parent=5 // pred_check
        _
      $region38: #{tpu_custom_call.1} parent=5 // pred_check_branch
        %219 = sbr.rel (%p216) target = $region40
      $region39: #{tpu_custom_call.1} parent=5 // pred_region
        %s220 = ssub.s32 %s18, 1
        %s221 = sand.u32 %s31, 1
        %s222 = scalar_lea.sflag [#allocation3], %s221
        %s223 = sand.u32 %s31, 1
        %s224 = smul.addr %s223, 16
        %s225 = scalar_lea.vmem [#allocation2], %s224
        // Predicated region
        $region41: #{tpu_custom_call.1} parent=39 // pred_check
          %p226 = pneg %p44
        $region42: #{tpu_custom_call.1} parent=39 // pred_check_branch
          %228 = sbr.rel (%p226) target = $region44
        $region43: #{tpu_custom_call.1} parent=39 // pred_region
          %229 = dma.done %s222, 256
        $region44: #{tpu_custom_call.1} parent=39 // pred_fallthru
          _
        // Predicated region
        $region45: #{tpu_custom_call.1} parent=39 // pred_check
          %p230 = pneg %p65
        $region46: #{tpu_custom_call.1} parent=39 // pred_check_branch
          %232 = sbr.rel (%p230) target = $region48
        $region47: #{tpu_custom_call.1} parent=39 // pred_region
          %233 = dma.done [#allocation6], 4096
        $region48: #{tpu_custom_call.1} parent=39 // pred_fallthru
          _
        %s234 = sand.u32 %s31, 1
        %s235 = scalar_lea.sflag [#allocation3], %s234
        %s236 = sand.u32 %s31, 1
        %s237 = smul.addr %s236, 16
        %s238 = scalar_lea.vmem [#allocation2], %s237
        %p239 = pneg %p44
        %p240 = pneg %p41
        %p241 = pneg %p65
        %p242 = pneg %p62
        %p243 = pneg %p86
        %p244 = pneg %p83
        %p245 = pneg %p107
        %p246 = pneg %p104
        %p247 = pneg %p128
        %p248 = pneg %p125
        %p249 = pneg %p154
        %p250 = pneg %p151
        %s251 = sand.u32 %s141, 1
        %s252 = scalar_lea.sflag [#allocation4], %s251
        %s253 = sand.u32 %s141, 1
        %s254 = smul.addr %s253, 16
        %s255 = scalar_lea.vmem [#allocation7], %s254
        %v256 = vld [vmem:[%s225] sm:$0xff]
        %v257 = vld [vmem:[%s225 + $0x8] sm:$0xff]
        %v258 = vpack.c.bf16 %v256, %v256
        %v259 = vpack.c.bf16 %v257, %v257
        %v260 = vld [vmem:[#allocation5] sm:$0xff]
        %v261 = vld [vmem:[#allocation5 + $0x8] sm:$0xff]
        %v262 = vld [vmem:[#allocation5 + $0x10] sm:$0xff]
        %v263 = vld [vmem:[#allocation5 + $0x18] sm:$0xff]
        %v264 = vld [vmem:[#allocation5 + $0x20] sm:$0xff]
        %v265 = vld [vmem:[#allocation5 + $0x28] sm:$0xff]
        %v266 = vld [vmem:[#allocation5 + $0x30] sm:$0xff]
        %v267 = vld [vmem:[#allocation5 + $0x38] sm:$0xff]
        %v268 = vld [vmem:[#allocation5 + $0x40] sm:$0xff]
        %v269 = vld [vmem:[#allocation5 + $0x48] sm:$0xff]
        %v270 = vld [vmem:[#allocation5 + $0x50] sm:$0xff]
        %v271 = vld [vmem:[#allocation5 + $0x58] sm:$0xff]
        %v272 = vld [vmem:[#allocation5 + $0x60] sm:$0xff]
        %v273 = vld [vmem:[#allocation5 + $0x68] sm:$0xff]
        %v274 = vld [vmem:[#allocation5 + $0x70] sm:$0xff]
        %v275 = vld [vmem:[#allocation5 + $0x78] sm:$0xff]
        %v276 = vld [vmem:[#allocation5 + $0x80] sm:$0xff]
        %v277 = vld [vmem:[#allocation5 + $0x88] sm:$0xff]
        %v278 = vld [vmem:[#allocation5 + $0x90] sm:$0xff]
        %v279 = vld [vmem:[#allocation5 + $0x98] sm:$0xff]
        %v280 = vld [vmem:[#allocation5 + $0xa0] sm:$0xff]
        %v281 = vld [vmem:[#allocation5 + $0xa8] sm:$0xff]
        %v282 = vld [vmem:[#allocation5 + $0xb0] sm:$0xff]
        %v283 = vld [vmem:[#allocation5 + $0xb8] sm:$0xff]
        %v284 = vld [vmem:[#allocation5 + $0xc0] sm:$0xff]
        %v285 = vld [vmem:[#allocation5 + $0xc8] sm:$0xff]
        %v286 = vld [vmem:[#allocation5 + $0xd0] sm:$0xff]
        %v287 = vld [vmem:[#allocation5 + $0xd8] sm:$0xff]
        %v288 = vld [vmem:[#allocation5 + $0xe0] sm:$0xff]
        %v289 = vld [vmem:[#allocation5 + $0xe8] sm:$0xff]
        %v290 = vld [vmem:[#allocation5 + $0xf0] sm:$0xff]
        %v291 = vld [vmem:[#allocation5 + $0xf8] sm:$0xff]
        %v292 = vld [vmem:[%s2] sm:$0x3]
        %v294 = vlaneseq
        %v295 = vshrl.u32 %v294, 7
        %v296 = vsub.s32 0, %v295
        %v297 = vrot.slane %v292, %v296
        %v298 = vlaneseq
        %v299 = vshrl.u32 %v298, 7
        %v300 = vsub.s32 1, %v299
        %v301 = vrot.slane %v292, %v300
        %v336 = vunpack.c.l.b16 %v260
        %v337 = vunpack.c.h.b16 %v260
        %v338 = vunpack.c.l.b16 %v261
        %v339 = vunpack.c.h.b16 %v261
        %v340 = vunpack.c.l.b16 %v262
        %v341 = vunpack.c.h.b16 %v262
        %v342 = vunpack.c.l.b16 %v263
        %v343 = vunpack.c.h.b16 %v263
        %v344 = vunpack.c.l.b16 %v264
        %v345 = vunpack.c.h.b16 %v264
        %v346 = vunpack.c.l.b16 %v265
        %v347 = vunpack.c.h.b16 %v265
        %v348 = vunpack.c.l.b16 %v266
        %v349 = vunpack.c.h.b16 %v266
        %v350 = vunpack.c.l.b16 %v267
        %v351 = vunpack.c.h.b16 %v267
        %v352 = vunpack.c.l.b16 %v268
        %v353 = vunpack.c.h.b16 %v268
        %v354 = vunpack.c.l.b16 %v269
        %v355 = vunpack.c.h.b16 %v269
        %v356 = vunpack.c.l.b16 %v270
        %v357 = vunpack.c.h.b16 %v270
        %v358 = vunpack.c.l.b16 %v271
        %v359 = vunpack.c.h.b16 %v271
        %v360 = vunpack.c.l.b16 %v272
        %v361 = vunpack.c.h.b16 %v272
        %v362 = vunpack.c.l.b16 %v273
        %v363 = vunpack.c.h.b16 %v273
        %v364 = vunpack.c.l.b16 %v274
        %v365 = vunpack.c.h.b16 %v274
        %v366 = vunpack.c.l.b16 %v275
        %v367 = vunpack.c.h.b16 %v275
        %v368 = vunpack.c.l.b16 %v276
        %v369 = vunpack.c.h.b16 %v276
        %v370 = vunpack.c.l.b16 %v277
        %v371 = vunpack.c.h.b16 %v277
        %v372 = vunpack.c.l.b16 %v278
        %v373 = vunpack.c.h.b16 %v278
        %v374 = vunpack.c.l.b16 %v279
        %v375 = vunpack.c.h.b16 %v279
        %v376 = vunpack.c.l.b16 %v280
        %v377 = vunpack.c.h.b16 %v280
        %v378 = vunpack.c.l.b16 %v281
        %v379 = vunpack.c.h.b16 %v281
        %v380 = vunpack.c.l.b16 %v282
        %v381 = vunpack.c.h.b16 %v282
        %v382 = vunpack.c.l.b16 %v283
        %v383 = vunpack.c.h.b16 %v283
        %v384 = vunpack.c.l.b16 %v284
        %v385 = vunpack.c.h.b16 %v284
        %v386 = vunpack.c.l.b16 %v285
        %v387 = vunpack.c.h.b16 %v285
        %v388 = vunpack.c.l.b16 %v286
        %v389 = vunpack.c.h.b16 %v286
        %v390 = vunpack.c.l.b16 %v287
        %v391 = vunpack.c.h.b16 %v287
        %v392 = vunpack.c.l.b16 %v288
        %v393 = vunpack.c.h.b16 %v288
        %v394 = vunpack.c.l.b16 %v289
        %v395 = vunpack.c.h.b16 %v289
        %v396 = vunpack.c.l.b16 %v290
        %v397 = vunpack.c.h.b16 %v290
        %v398 = vunpack.c.l.b16 %v291
        %v399 = vunpack.c.h.b16 %v291
        %v400 = vpack.c.b16 %v338, %v336
        %v401 = vpack.c.b16 %v339, %v337
        %v402 = vpack.c.b16 %v342, %v340
        %v403 = vpack.c.b16 %v343, %v341
        %v404 = vpack.c.b16 %v346, %v344
        %v405 = vpack.c.b16 %v347, %v345
        %v406 = vpack.c.b16 %v350, %v348
        %v407 = vpack.c.b16 %v351, %v349
        %v408 = vpack.c.b16 %v354, %v352
        %v409 = vpack.c.b16 %v355, %v353
        %v410 = vpack.c.b16 %v358, %v356
        %v411 = vpack.c.b16 %v359, %v357
        %v412 = vpack.c.b16 %v362, %v360
        %v413 = vpack.c.b16 %v363, %v361
        %v414 = vpack.c.b16 %v366, %v364
        %v415 = vpack.c.b16 %v367, %v365
        %v416 = vpack.c.b16 %v370, %v368
        %v417 = vpack.c.b16 %v371, %v369
        %v418 = vpack.c.b16 %v374, %v372
        %v419 = vpack.c.b16 %v375, %v373
        %v420 = vpack.c.b16 %v378, %v376
        %v421 = vpack.c.b16 %v379, %v377
        %v422 = vpack.c.b16 %v382, %v380
        %v423 = vpack.c.b16 %v383, %v381
        %v424 = vpack.c.b16 %v386, %v384
        %v425 = vpack.c.b16 %v387, %v385
        %v426 = vpack.c.b16 %v390, %v388
        %v427 = vpack.c.b16 %v391, %v389
        %v428 = vpack.c.b16 %v394, %v392
        %v429 = vpack.c.b16 %v395, %v393
        %v430 = vpack.c.b16 %v398, %v396
        %v431 = vpack.c.b16 %v399, %v397
        %464 = vmatprep.subr.bf16.mxu0 %v401
        %465 = vmatpush1.bf16.msra.mxu0 %v400
        %466 = vmatprep.subr.bf16.mxu0 %v403
        %467 = vmatpush1.bf16.msra.mxu0 %v402
        %468 = vmatprep.subr.bf16.mxu0 %v405
        %469 = vmatpush1.bf16.msra.mxu0 %v404
        %470 = vmatprep.subr.bf16.mxu0 %v407
        %471 = vmatpush1.bf16.msra.mxu0 %v406
        %472 = vmatprep.subr.bf16.mxu0 %v409
        %473 = vmatpush1.bf16.msra.mxu0 %v408
        %474 = vmatprep.subr.bf16.mxu0 %v411
        %475 = vmatpush1.bf16.msra.mxu0 %v410
        %476 = vmatprep.subr.bf16.mxu0 %v413
        %477 = vmatpush1.bf16.msra.mxu0 %v412
        %478 = vmatprep.subr.bf16.mxu0 %v415
        %479 = vmatpush1.bf16.msra.mxu0 %v414
        %480 = vmatprep.subr.bf16.mxu0 %v417
        %481 = vmatpush1.bf16.msra.mxu0 %v416
        %482 = vmatprep.subr.bf16.mxu0 %v419
        %483 = vmatpush1.bf16.msra.mxu0 %v418
        %484 = vmatprep.subr.bf16.mxu0 %v421
        %485 = vmatpush1.bf16.msra.mxu0 %v420
        %486 = vmatprep.subr.bf16.mxu0 %v423
        %487 = vmatpush1.bf16.msra.mxu0 %v422
        %488 = vmatprep.subr.bf16.mxu0 %v425
        %489 = vmatpush1.bf16.msra.mxu0 %v424
        %490 = vmatprep.subr.bf16.mxu0 %v427
        %491 = vmatpush1.bf16.msra.mxu0 %v426
        %492 = vmatprep.subr.bf16.mxu0 %v429
        %493 = vmatpush1.bf16.msra.mxu0 %v428
        %494 = vmatprep.subr.bf16.mxu0 %v431
        %495 = vmatpush1.bf16.msra.mxu0 %v430
        %496 = vmatprep.mubr.bf16.mxu0 %v259
        %497 = vmatmul.mubr.bf16.gmra.mrb[0].mxu0 %v258
        %v498 = vpop.f32.mrb[0].mxu0
        %v499 = vadd.f32 %v297, %v498
        %v500 = vpop.f32.mrb[0].mxu0
        %v501 = vadd.f32 %v301, %v500
        %v502 = vpop.f32.mrb[0].mxu0
        %v503 = vpop.f32.mrb[0].mxu0
        %504 = vdwg.mxu0
        %v505 = vmul.f32 %v499, 0.5
        %v506 = vmul.f32 %v501, 0.5
        %v507 = vmul.f32 %v499, 0.70710856
        %v508 = vmul.f32 %v501, 0.70710856
        %v509 = verf.f32.pop %v507
        %v510 = verf.f32.pop %v508
        %v511 = vadd.f32 %v509, 1.0
        %v512 = vadd.f32 %v510, 1.0
        %v513 = vmul.f32 %v505, %v511
        %v514 = vmul.f32 %v506, %v512
        %v515 = vadd.f32 %v513, %v514
        %516 = vadd.xlane.f32.xlu0 %v515
        %v517 = vpop.xlane.xlu0 %516
        %v518 = vrcp.pop 256.0
        %v519 = vmul.f32 %v517, %v518
        %v520 = vsub.f32 %v513, %v519
        %v521 = vsub.f32 %v514, %v519
        %v522 = vmul.f32 %v520, %v520
        %v523 = vmul.f32 %v521, %v521
        %v524 = vadd.f32 %v522, %v523
        %525 = vadd.xlane.f32.xlu0 %v524
        %v526 = vpop.xlane.xlu0 %525
        %v527 = vmul.f32 %v526, %v518
        %v528 = vadd.f32 %v527, 1e-12
        %v529 = vrsqrt.pop %v528
        %v530 = vmul.f32 %v520, %v529
        %v531 = vmul.f32 %v521, %v529
        %v532 = vld [vmem:[%s3] sm:$0x3]
        %v534 = vlaneseq
        %v535 = vshrl.u32 %v534, 7
        %v536 = vsub.s32 0, %v535
        %v537 = vrot.slane %v532, %v536
        %v538 = vlaneseq
        %v539 = vshrl.u32 %v538, 7
        %v540 = vsub.s32 1, %v539
        %v541 = vrot.slane %v532, %v540
        %v544 = vmul.f32 %v530, %v537
        %v545 = vmul.f32 %v531, %v541
        %v546 = vld [vmem:[%s4] sm:$0x3]
        %v548 = vlaneseq
        %v549 = vshrl.u32 %v548, 7
        %v550 = vsub.s32 0, %v549
        %v551 = vrot.slane %v546, %v550
        %v552 = vlaneseq
        %v553 = vshrl.u32 %v552, 7
        %v554 = vsub.s32 1, %v553
        %v555 = vrot.slane %v546, %v554
        %v558 = vadd.f32 %v544, %v551
        %v559 = vadd.f32 %v545, %v555
        %560 = vst [vmem:[%s255] sm:$0xff] %v558
        %561 = vst [vmem:[%s255 + $0x8] sm:$0xff] %v559
        %s562 = sand.u32 %s141, 1
        %s563 = scalar_lea.sflag [#allocation4], %s562
        %s564 = sand.u32 %s141, 1
        %s565 = smul.addr %s564, 16
        %s566 = scalar_lea.vmem [#allocation7], %s565
        // Predicated region
        $region49: #{tpu_custom_call.1} parent=39 // pred_check
          %p567 = pneg %p151
        $region50: #{tpu_custom_call.1} parent=39 // pred_check_branch
          %569 = sbr.rel (%p567) target = $region52
        $region51: #{tpu_custom_call.1} parent=39 // pred_region
          %s571 = ssub.s32 256, 256
          %572 = vsyncadd %s563, %s571
          %s573 = smul.addr %s23, 2
          %s574 = smul.addr %s573, 128
          %s575 = scalar_lea.hbm %s5, %s574
          %s577 = sshll.u32 %s566, 4
          %s578 = int_to_ptr.vmem [resolvable:$true] %s577
          %580 = dma.vmem_to_hbm [thread:$0]  %s578, 256, %s575, %s563
        $region52: #{tpu_custom_call.1} parent=39 // pred_fallthru
          _
      $region40: #{tpu_custom_call.1} parent=5 // pred_fallthru
        _
      %p581 = scmp.le.s32.totalorder 2, %s18
      // Predicated region
      $region53: #{tpu_custom_call.1} parent=5 // pred_check
        %p582 = pneg %p581
      $region54: #{tpu_custom_call.1} parent=5 // pred_check_branch
        %584 = sbr.rel (%p582) target = $region56
      $region55: #{tpu_custom_call.1} parent=5 // pred_region
        %s585 = ssub.s32 %s18, 2
        // Predicated region
        $region57: #{tpu_custom_call.1} parent=55 // pred_check
          %p586 = pneg %p157
        $region58: #{tpu_custom_call.1} parent=55 // pred_check_branch
          %588 = sbr.rel (%p586) target = $region60
        $region59: #{tpu_custom_call.1} parent=55 // pred_region
          %s589 = sand.u32 %s142, 1
          %s590 = scalar_lea.sflag [#allocation4], %s589
          %s591 = sand.u32 %s142, 1
          %s592 = smul.addr %s591, 16
          %s593 = scalar_lea.vmem [#allocation7], %s592
          %594 = dma.done %s590, 256
        $region60: #{tpu_custom_call.1} parent=55 // pred_fallthru
          _
      $region56: #{tpu_custom_call.1} parent=5 // pred_fallthru
        _
    $region6: #{tpu_custom_call.1} parent=1 // loop_footer
      %s22 = sadd.s32 1, %s18
    $region7: #{tpu_custom_call.1} parent=1 // loop_footer_branch
      %17 = sbr.rel target = $region3
    $region8: #{tpu_custom_call.1} parent=1 // loop_exit
      _
    %595 = vsyncpa [#allocation3], 1
    %s596 = scalar_lea.sflag [#allocation3], 1
    %597 = vsyncpa %s596, 1
    %598 = vsyncpa [#allocation6], 1
    %599 = vsyncpa [#allocation4], 1
    %s600 = scalar_lea.sflag [#allocation4], 1
    %601 = vsyncpa %s600, 1

// kernel: tpu_custom_call.1
$region0: #{tpu_custom_call.1}
  #allocation0 [shape = 'u32[]', space=smem, size = 0x4, offset = 0x4, fixed_abs, tag = 'smem constant byte address 0x4 - core index']
  #allocation1 [shape = 'u32[144,128]{1,0:T(1,128)}', space=vmem, size = 0x12000, scoped, tag = 'internal scratch']
  %s0 = inlined_call_operand.hbm [shape: f32[16,256], index: 0, kind: input, shape index: {}]
  %s1 = inlined_call_operand.hbm [shape: bf16[256,256], index: 1, kind: input, shape index: {}]
  %s2 = inlined_call_operand.vmem [shape: f32[1,256], index: 2, kind: input, shape index: {}]
  %s3 = inlined_call_operand.vmem [shape: f32[1,256], index: 3, kind: input, shape index: {}]
  %s4 = inlined_call_operand.vmem [shape: f32[1,256], index: 4, kind: input, shape index: {}]
  %s5 = inlined_call_operand.hbm [shape: f32[16,256], index: 5, kind: output, shape index: {}]
  %s6 = sld [smem:[#allocation0]]
  $region61: #{tpu_custom_call.1} parent=0
    _
  %s8 = ssub.s32 1, %s6
  %s9 = scalar_select 0, %s8, %s6
  $region1: #{tpu_custom_call.1} parent=0
    #allocation2 [shape = 'u8[16384]{0}', space=vmem, size = 0x4000, scoped, tag = 'input window, operand 0']
    #allocation3 [shape = 's32[2]{0}', space=sflag, size = 0x8, scoped, tag = 'scoped memory for tpu_custom_call.1']
    #allocation4 [shape = 's32[2]{0}', space=sflag, size = 0x8, scoped, tag = 'scoped memory for tpu_custom_call.1']
    #allocation5 [shape = 'u8[131072]{0}', space=vmem, size = 0x20000, scoped, tag = 'input window, operand 1, single buffered']
    #allocation6 [shape = 's32[1]{0}', space=sflag, size = 0x4, scoped, tag = 'scoped memory for tpu_custom_call.1']
    #allocation7 [shape = 'u8[16384]{0}', space=vmem, size = 0x4000, scoped, tag = 'output window, operand 0']
    %10 = vsyncpa [#allocation3], 0
    %s11 = scalar_lea.sflag [#allocation3], 1
    %12 = vsyncpa %s11, 0
    %13 = vsyncpa [#allocation6], 0
    %14 = vsyncpa [#allocation4], 0
    %s15 = scalar_lea.sflag [#allocation4], 1
    %16 = vsyncpa %s15, 0
    loop: start=0, step=1, limit=4
    $region2: #{tpu_custom_call.1} parent=1 // loop_pre_header
      _
    $region3: #{tpu_custom_call.1} parent=1 // loop_header
      %s18 = sphi 0, %s22
      %p19 = scmp.ge.s32.totalorder %s18, 4
      %s28 = sphi 0, %s30
      %s31 = sphi 0, %s28
      %s32 = sphi 0, %s31
      %s48 = sphi 0, %s32
      %s52 = sphi 0, %s52
      %s54 = sphi 0, %s52
      %s55 = sphi 0, %s54
      %s69 = sphi 0, %s55
      %s73 = sphi 0, %s73
      %s75 = sphi 0, %s73
      %s76 = sphi 0, %s75
      %s90 = sphi 0, %s76
      %s94 = sphi 0, %s94
      %s96 = sphi 0, %s94
      %s97 = sphi 0, %s96
      %s111 = sphi 0, %s97
      %s115 = sphi 0, %s115
      %s117 = sphi 0, %s115
      %s118 = sphi 0, %s117
      %s132 = sphi 0, %s118
      %s138 = sphi 0, %s140
      %s141 = sphi 0, %s138
      %s142 = sphi 0, %s141
      %s158 = sphi 0, %s142
    $region4: #{tpu_custom_call.1} parent=1 // loop_header_branch
      %21 = sbr.rel (%p19) target = $region8
    $region5: #{tpu_custom_call.1} parent=1 // loop_body
      %s23 = ssub.s32 %s18, 1
      %s24 = ssub.s32 %s18, 2
      %s25 = sadd.s32 %s18, 1
      %s26 = ssub.s32 %s18, %s25
      %p27 = scmp.eq.s32.totalorder %s26, 0
      %s29 = sadd.s32 %s28, 1
      %s30 = scalar_select %p27, %s28, %s29
      %p33 = pneg %p27
      %p34 = scmp.eq.s32.totalorder %s18, 1
      %p35 = por %p33, %p34
      %p36 = scmp.ne.s32.totalorder %s28, %s31
      %p37 = scmp.eq.s32.totalorder %s18, 0
      %p38 = por %p36, %p37
      %p39 = scmp.ne.s32.totalorder %s28, %s31
      %p40 = scmp.eq.s32.totalorder %s23, 1
      %p41 = por %p39, %p40
      %p42 = scmp.ne.s32.totalorder %s31, %s32
      %p43 = scmp.eq.s32.totalorder %s23, 0
      %p44 = por %p42, %p43
      %p45 = scmp.ne.s32.totalorder %s31, %s32
      %p46 = scmp.eq.s32.totalorder %s24, 1
      %p47 = por %p45, %p46
      %p49 = scmp.ne.s32.totalorder %s32, %s48
      %p50 = scmp.eq.s32.totalorder %s24, 0
      %p51 = por %p49, %p50
      %s53 = sadd.s32 %s52, 1
      %p56 = scmp.eq.s32.totalorder %s18, 1
      %p57 = scmp.ne.s32.totalorder %s52, %s54
      %p58 = scmp.eq.s32.totalorder %s18, 0
      %p59 = por %p57, %p58
      %p60 = scmp.ne.s32.totalorder %s52, %s54
      %p61 = scmp.eq.s32.totalorder %s23, 1
      %p62 = por %p60, %p61
      %p63 = scmp.ne.s32.totalorder %s54, %s55
      %p64 = scmp.eq.s32.totalorder %s23, 0
      %p65 = por %p63, %p64
      %p66 = scmp.ne.s32.totalorder %s54, %s55
      %p67 = scmp.eq.s32.totalorder %s24, 1
      %p68 = por %p66, %p67
      %p70 = scmp.ne.s32.totalorder %s55, %s69
      %p71 = scmp.eq.s32.totalorder %s24, 0
      %p72 = por %p70, %p71
      %s74 = sadd.s32 %s73, 1
      %p77 = scmp.eq.s32.totalorder %s18, 1
      %p78 = scmp.ne.s32.totalorder %s73, %s75
      %p79 = scmp.eq.s32.totalorder %s18, 0
      %p80 = por %p78, %p79
      %p81 = scmp.ne.s32.totalorder %s73, %s75
      %p82 = scmp.eq.s32.totalorder %s23, 1
      %p83 = por %p81, %p82
      %p84 = scmp.ne.s32.totalorder %s75, %s76
      %p85 = scmp.eq.s32.totalorder %s23, 0
      %p86 = por %p84, %p85
      %p87 = scmp.ne.s32.totalorder %s75, %s76
      %p88 = scmp.eq.s32.totalorder %s24, 1
      %p89 = por %p87, %p88
      %p91 = scmp.ne.s32.totalorder %s76, %s90
      %p92 = scmp.eq.s32.totalorder %s24, 0
      %p93 = por %p91, %p92
      %s95 = sadd.s32 %s94, 1
      %p98 = scmp.eq.s32.totalorder %s18, 1
      %p99 = scmp.ne.s32.totalorder %s94, %s96
      %p100 = scmp.eq.s32.totalorder %s18, 0
      %p101 = por %p99, %p100
      %p102 = scmp.ne.s32.totalorder %s94, %s96
      %p103 = scmp.eq.s32.totalorder %s23, 1
      %p104 = por %p102, %p103
      %p105 = scmp.ne.s32.totalorder %s96, %s97
      %p106 = scmp.eq.s32.totalorder %s23, 0
      %p107 = por %p105, %p106
      %p108 = scmp.ne.s32.totalorder %s96, %s97
      %p109 = scmp.eq.s32.totalorder %s24, 1
      %p110 = por %p108, %p109
      %p112 = scmp.ne.s32.totalorder %s97, %s111
      %p113 = scmp.eq.s32.totalorder %s24, 0
      %p114 = por %p112, %p113
      %s116 = sadd.s32 %s115, 1
      %p119 = scmp.eq.s32.totalorder %s18, 1
      %p120 = scmp.ne.s32.totalorder %s115, %s117
      %p121 = scmp.eq.s32.totalorder %s18, 0
      %p122 = por %p120, %p121
      %p123 = scmp.ne.s32.totalorder %s115, %s117
      %p124 = scmp.eq.s32.totalorder %s23, 1
      %p125 = por %p123, %p124
      %p126 = scmp.ne.s32.totalorder %s117, %s118
      %p127 = scmp.eq.s32.totalorder %s23, 0
      %p128 = por %p126, %p127
      %p129 = scmp.ne.s32.totalorder %s117, %s118
      %p130 = scmp.eq.s32.totalorder %s24, 1
      %p131 = por %p129, %p130
      %p133 = scmp.ne.s32.totalorder %s118, %s132
      %p134 = scmp.eq.s32.totalorder %s24, 0
      %p135 = por %p133, %p134
      %s136 = ssub.s32 %s18, %s25
      %p137 = scmp.eq.s32.totalorder %s136, 0
      %s139 = sadd.s32 %s138, 1
      %s140 = scalar_select %p137, %s138, %s139
      %p143 = pneg %p137
      %p144 = scmp.eq.s32.totalorder %s18, 1
      %p145 = por %p143, %p144
      %p146 = scmp.ne.s32.totalorder %s138, %s141
      %p147 = scmp.eq.s32.totalorder %s18, 0
      %p148 = por %p146, %p147
      %p149 = scmp.ne.s32.totalorder %s138, %s141
      %p150 = scmp.eq.s32.totalorder %s23, 1
      %p151 = por %p149, %p150
      %p152 = scmp.ne.s32.totalorder %s141, %s142
      %p153 = scmp.eq.s32.totalorder %s23, 0
      %p154 = por %p152, %p153
      %p155 = scmp.ne.s32.totalorder %s141, %s142
      %p156 = scmp.eq.s32.totalorder %s24, 1
      %p157 = por %p155, %p156
      %p159 = scmp.ne.s32.totalorder %s142, %s158
      %p160 = scmp.eq.s32.totalorder %s24, 0
      %p161 = por %p159, %p160
      %p162 = scmp.le.s32.totalorder 1, %s18
      %p163 = scmp.lt.s32.totalorder %s18, 3
      %p164 = pnand %p162, %p163
      %p165 = pneg %p164
      // Predicated region
      $region9: #{tpu_custom_call.1} parent=5 // pred_check
        _
      $region10: #{tpu_custom_call.1} parent=5 // pred_check_branch
        %167 = sbr.rel (%p164) target = $region12
      $region11: #{tpu_custom_call.1} parent=5 // pred_region
        %s168 = ssub.s32 %s18, 1
        // Predicated region
        $region13: #{tpu_custom_call.1} parent=11 // pred_check
          %p169 = pneg %p65
        $region14: #{tpu_custom_call.1} parent=11 // pred_check_branch
          %171 = sbr.rel (%p169) target = $region16
        $region15: #{tpu_custom_call.1} parent=11 // pred_region
          %s173 = ssub.s32 4096, 4096
          %174 = vsyncadd [#allocation6], %s173
          %s175 = sshll.u32 [#allocation5], 4
          %s176 = int_to_ptr.vmem [resolvable:$true] %s175
          %181 = dma.hbm_to_vmem [thread:$0]  %s1, 4096, %s176, [#allocation6], 128, 128, 8
        $region16: #{tpu_custom_call.1} parent=11 // pred_fallthru
          _
        // Predicated region
        $region17: #{tpu_custom_call.1} parent=11 // pred_check
          %p182 = pneg %p86
        $region18: #{tpu_custom_call.1} parent=11 // pred_check_branch
          %184 = sbr.rel (%p182) target = $region20
        $region19: #{tpu_custom_call.1} parent=11 // pred_region
          _
        $region20: #{tpu_custom_call.1} parent=11 // pred_fallthru
          _
        // Predicated region
        $region21: #{tpu_custom_call.1} parent=11 // pred_check
          %p185 = pneg %p107
        $region22: #{tpu_custom_call.1} parent=11 // pred_check_branch
          %187 = sbr.rel (%p185) target = $region24
        $region23: #{tpu_custom_call.1} parent=11 // pred_region
          _
        $region24: #{tpu_custom_call.1} parent=11 // pred_fallthru
          _
        // Predicated region
        $region25: #{tpu_custom_call.1} parent=11 // pred_check
          %p188 = pneg %p128
        $region26: #{tpu_custom_call.1} parent=11 // pred_check_branch
          %190 = sbr.rel (%p188) target = $region28
        $region27: #{tpu_custom_call.1} parent=11 // pred_region
          _
        $region28: #{tpu_custom_call.1} parent=11 // pred_fallthru
          _
      $region12: #{tpu_custom_call.1} parent=5 // pred_fallthru
        _
      %p191 = scmp.lt.s32.totalorder %s18, 2
      // Predicated region
      $region29: #{tpu_custom_call.1} parent=5 // pred_check
        %p192 = pneg %p191
      $region30: #{tpu_custom_call.1} parent=5 // pred_check_branch
        %194 = sbr.rel (%p192) target = $region32
      $region31: #{tpu_custom_call.1} parent=5 // pred_region
        // Predicated region
        $region33: #{tpu_custom_call.1} parent=31 // pred_check
          %p195 = pneg %p38
        $region34: #{tpu_custom_call.1} parent=31 // pred_check_branch
          %197 = sbr.rel (%p195) target = $region36
        $region35: #{tpu_custom_call.1} parent=31 // pred_region
          %s198 = sand.u32 %s28, 1
          %s199 = scalar_lea.sflag [#allocation3], %s198
          %s200 = sand.u32 %s28, 1
          %s201 = smul.addr %s200, 16
          %s202 = scalar_lea.vmem [#allocation2], %s201
          %s204 = ssub.s32 256, 256
          %205 = vsyncadd %s199, %s204
          %s206 = smul.addr %s18, 2
          %s207 = smul.addr %s206, 128
          %s208 = scalar_lea.hbm %s0, %s207
          %s210 = sshll.u32 %s202, 4
          %s211 = int_to_ptr.vmem [resolvable:$true] %s210
          %213 = dma.hbm_to_vmem [thread:$0]  %s208, 256, %s211, %s199
        $region36: #{tpu_custom_call.1} parent=31 // pred_fallthru
          _
      $region32: #{tpu_custom_call.1} parent=5 // pred_fallthru
        _
      %p214 = scmp.le.s32.totalorder 1, %s18
      %p215 = scmp.lt.s32.totalorder %s18, 3
      %p216 = pnand %p214, %p215
      %p217 = pneg %p216
      // Predicated region
      $region37: #{tpu_custom_call.1} parent=5 // pred_check
        _
      $region38: #{tpu_custom_call.1} parent=5 // pred_check_branch
        %219 = sbr.rel (%p216) target = $region40
      $region39: #{tpu_custom_call.1} parent=5 // pred_region
        %s220 = ssub.s32 %s18, 1
        %s221 = sand.u32 %s31, 1
        %s222 = scalar_lea.sflag [#allocation3], %s221
        %s223 = sand.u32 %s31, 1
        %s224 = smul.addr %s223, 16
        %s225 = scalar_lea.vmem [#allocation2], %s224
        // Predicated region
        $region41: #{tpu_custom_call.1} parent=39 // pred_check
          %p226 = pneg %p44
        $region42: #{tpu_custom_call.1} parent=39 // pred_check_branch
          %228 = sbr.rel (%p226) target = $region44
        $region43: #{tpu_custom_call.1} parent=39 // pred_region
          %229 = dma.done %s222, 256
        $region44: #{tpu_custom_call.1} parent=39 // pred_fallthru
          _
        // Predicated region
        $region45: #{tpu_custom_call.1} parent=39 // pred_check
          %p230 = pneg %p65
        $region46: #{tpu_custom_call.1} parent=39 // pred_check_branch
          %232 = sbr.rel (%p230) target = $region48
        $region47: #{tpu_custom_call.1} parent=39 // pred_region
          %233 = dma.done [#allocation6], 4096
        $region48: #{tpu_custom_call.1} parent=39 // pred_fallthru
          _
        %s234 = sand.u32 %s31, 1
        %s235 = scalar_lea.sflag [#allocation3], %s234
        %s236 = sand.u32 %s31, 1
        %s237 = smul.addr %s236, 16
        %s238 = scalar_lea.vmem [#allocation2], %s237
        %p239 = pneg %p44
        %p240 = pneg %p41
        %p241 = pneg %p65
        %p242 = pneg %p62
        %p243 = pneg %p86
        %p244 = pneg %p83
        %p245 = pneg %p107
        %p246 = pneg %p104
        %p247 = pneg %p128
        %p248 = pneg %p125
        %p249 = pneg %p154
        %p250 = pneg %p151
        %s251 = sand.u32 %s141, 1
        %s252 = scalar_lea.sflag [#allocation4], %s251
        %s253 = sand.u32 %s141, 1
        %s254 = smul.addr %s253, 16
        %s255 = scalar_lea.vmem [#allocation7], %s254
        %v256 = vld [vmem:[%s225] sm:$0xff]
        %v257 = vld [vmem:[%s225 + $0x8] sm:$0xff]
        %v258 = vpack.c.bf16 %v256, %v256
        %v259 = vpack.c.bf16 %v257, %v257
        %v260 = vld [vmem:[#allocation5] sm:$0xff]
        %v261 = vld [vmem:[#allocation5 + $0x8] sm:$0xff]
        %v262 = vld [vmem:[#allocation5 + $0x10] sm:$0xff]
        %v263 = vld [vmem:[#allocation5 + $0x18] sm:$0xff]
        %v264 = vld [vmem:[#allocation5 + $0x20] sm:$0xff]
        %v265 = vld [vmem:[#allocation5 + $0x28] sm:$0xff]
        %v266 = vld [vmem:[#allocation5 + $0x30] sm:$0xff]
        %v267 = vld [vmem:[#allocation5 + $0x38] sm:$0xff]
        %v268 = vld [vmem:[#allocation5 + $0x40] sm:$0xff]
        %v269 = vld [vmem:[#allocation5 + $0x48] sm:$0xff]
        %v270 = vld [vmem:[#allocation5 + $0x50] sm:$0xff]
        %v271 = vld [vmem:[#allocation5 + $0x58] sm:$0xff]
        %v272 = vld [vmem:[#allocation5 + $0x60] sm:$0xff]
        %v273 = vld [vmem:[#allocation5 + $0x68] sm:$0xff]
        %v274 = vld [vmem:[#allocation5 + $0x70] sm:$0xff]
        %v275 = vld [vmem:[#allocation5 + $0x78] sm:$0xff]
        %v276 = vld [vmem:[#allocation5 + $0x80] sm:$0xff]
        %v277 = vld [vmem:[#allocation5 + $0x88] sm:$0xff]
        %v278 = vld [vmem:[#allocation5 + $0x90] sm:$0xff]
        %v279 = vld [vmem:[#allocation5 + $0x98] sm:$0xff]
        %v280 = vld [vmem:[#allocation5 + $0xa0] sm:$0xff]
        %v281 = vld [vmem:[#allocation5 + $0xa8] sm:$0xff]
        %v282 = vld [vmem:[#allocation5 + $0xb0] sm:$0xff]
        %v283 = vld [vmem:[#allocation5 + $0xb8] sm:$0xff]
        %v284 = vld [vmem:[#allocation5 + $0xc0] sm:$0xff]
        %v285 = vld [vmem:[#allocation5 + $0xc8] sm:$0xff]
        %v286 = vld [vmem:[#allocation5 + $0xd0] sm:$0xff]
        %v287 = vld [vmem:[#allocation5 + $0xd8] sm:$0xff]
        %v288 = vld [vmem:[#allocation5 + $0xe0] sm:$0xff]
        %v289 = vld [vmem:[#allocation5 + $0xe8] sm:$0xff]
        %v290 = vld [vmem:[#allocation5 + $0xf0] sm:$0xff]
        %v291 = vld [vmem:[#allocation5 + $0xf8] sm:$0xff]
        %v292 = vld [vmem:[%s2] sm:$0x3]
        %v294 = vlaneseq
        %v295 = vshrl.u32 %v294, 7
        %v296 = vsub.s32 0, %v295
        %v297 = vrot.slane %v292, %v296
        %v298 = vlaneseq
        %v299 = vshrl.u32 %v298, 7
        %v300 = vsub.s32 1, %v299
        %v301 = vrot.slane %v292, %v300
        %v336 = vunpack.c.l.b16 %v260
        %v337 = vunpack.c.h.b16 %v260
        %v338 = vunpack.c.l.b16 %v261
        %v339 = vunpack.c.h.b16 %v261
        %v340 = vunpack.c.l.b16 %v262
        %v341 = vunpack.c.h.b16 %v262
        %v342 = vunpack.c.l.b16 %v263
        %v343 = vunpack.c.h.b16 %v263
        %v344 = vunpack.c.l.b16 %v264
        %v345 = vunpack.c.h.b16 %v264
        %v346 = vunpack.c.l.b16 %v265
        %v347 = vunpack.c.h.b16 %v265
        %v348 = vunpack.c.l.b16 %v266
        %v349 = vunpack.c.h.b16 %v266
        %v350 = vunpack.c.l.b16 %v267
        %v351 = vunpack.c.h.b16 %v267
        %v352 = vunpack.c.l.b16 %v268
        %v353 = vunpack.c.h.b16 %v268
        %v354 = vunpack.c.l.b16 %v269
        %v355 = vunpack.c.h.b16 %v269
        %v356 = vunpack.c.l.b16 %v270
        %v357 = vunpack.c.h.b16 %v270
        %v358 = vunpack.c.l.b16 %v271
        %v359 = vunpack.c.h.b16 %v271
        %v360 = vunpack.c.l.b16 %v272
        %v361 = vunpack.c.h.b16 %v272
        %v362 = vunpack.c.l.b16 %v273
        %v363 = vunpack.c.h.b16 %v273
        %v364 = vunpack.c.l.b16 %v274
        %v365 = vunpack.c.h.b16 %v274
        %v366 = vunpack.c.l.b16 %v275
        %v367 = vunpack.c.h.b16 %v275
        %v368 = vunpack.c.l.b16 %v276
        %v369 = vunpack.c.h.b16 %v276
        %v370 = vunpack.c.l.b16 %v277
        %v371 = vunpack.c.h.b16 %v277
        %v372 = vunpack.c.l.b16 %v278
        %v373 = vunpack.c.h.b16 %v278
        %v374 = vunpack.c.l.b16 %v279
        %v375 = vunpack.c.h.b16 %v279
        %v376 = vunpack.c.l.b16 %v280
        %v377 = vunpack.c.h.b16 %v280
        %v378 = vunpack.c.l.b16 %v281
        %v379 = vunpack.c.h.b16 %v281
        %v380 = vunpack.c.l.b16 %v282
        %v381 = vunpack.c.h.b16 %v282
        %v382 = vunpack.c.l.b16 %v283
        %v383 = vunpack.c.h.b16 %v283
        %v384 = vunpack.c.l.b16 %v284
        %v385 = vunpack.c.h.b16 %v284
        %v386 = vunpack.c.l.b16 %v285
        %v387 = vunpack.c.h.b16 %v285
        %v388 = vunpack.c.l.b16 %v286
        %v389 = vunpack.c.h.b16 %v286
        %v390 = vunpack.c.l.b16 %v287
        %v391 = vunpack.c.h.b16 %v287
        %v392 = vunpack.c.l.b16 %v288
        %v393 = vunpack.c.h.b16 %v288
        %v394 = vunpack.c.l.b16 %v289
        %v395 = vunpack.c.h.b16 %v289
        %v396 = vunpack.c.l.b16 %v290
        %v397 = vunpack.c.h.b16 %v290
        %v398 = vunpack.c.l.b16 %v291
        %v399 = vunpack.c.h.b16 %v291
        %v400 = vpack.c.b16 %v338, %v336
        %v401 = vpack.c.b16 %v339, %v337
        %v402 = vpack.c.b16 %v342, %v340
        %v403 = vpack.c.b16 %v343, %v341
        %v404 = vpack.c.b16 %v346, %v344
        %v405 = vpack.c.b16 %v347, %v345
        %v406 = vpack.c.b16 %v350, %v348
        %v407 = vpack.c.b16 %v351, %v349
        %v408 = vpack.c.b16 %v354, %v352
        %v409 = vpack.c.b16 %v355, %v353
        %v410 = vpack.c.b16 %v358, %v356
        %v411 = vpack.c.b16 %v359, %v357
        %v412 = vpack.c.b16 %v362, %v360
        %v413 = vpack.c.b16 %v363, %v361
        %v414 = vpack.c.b16 %v366, %v364
        %v415 = vpack.c.b16 %v367, %v365
        %v416 = vpack.c.b16 %v370, %v368
        %v417 = vpack.c.b16 %v371, %v369
        %v418 = vpack.c.b16 %v374, %v372
        %v419 = vpack.c.b16 %v375, %v373
        %v420 = vpack.c.b16 %v378, %v376
        %v421 = vpack.c.b16 %v379, %v377
        %v422 = vpack.c.b16 %v382, %v380
        %v423 = vpack.c.b16 %v383, %v381
        %v424 = vpack.c.b16 %v386, %v384
        %v425 = vpack.c.b16 %v387, %v385
        %v426 = vpack.c.b16 %v390, %v388
        %v427 = vpack.c.b16 %v391, %v389
        %v428 = vpack.c.b16 %v394, %v392
        %v429 = vpack.c.b16 %v395, %v393
        %v430 = vpack.c.b16 %v398, %v396
        %v431 = vpack.c.b16 %v399, %v397
        %464 = vmatprep.subr.bf16.mxu0 %v401
        %465 = vmatpush1.bf16.msra.mxu0 %v400
        %466 = vmatprep.subr.bf16.mxu0 %v403
        %467 = vmatpush1.bf16.msra.mxu0 %v402
        %468 = vmatprep.subr.bf16.mxu0 %v405
        %469 = vmatpush1.bf16.msra.mxu0 %v404
        %470 = vmatprep.subr.bf16.mxu0 %v407
        %471 = vmatpush1.bf16.msra.mxu0 %v406
        %472 = vmatprep.subr.bf16.mxu0 %v409
        %473 = vmatpush1.bf16.msra.mxu0 %v408
        %474 = vmatprep.subr.bf16.mxu0 %v411
        %475 = vmatpush1.bf16.msra.mxu0 %v410
        %476 = vmatprep.subr.bf16.mxu0 %v413
        %477 = vmatpush1.bf16.msra.mxu0 %v412
        %478 = vmatprep.subr.bf16.mxu0 %v415
        %479 = vmatpush1.bf16.msra.mxu0 %v414
        %480 = vmatprep.subr.bf16.mxu0 %v417
        %481 = vmatpush1.bf16.msra.mxu0 %v416
        %482 = vmatprep.subr.bf16.mxu0 %v419
        %483 = vmatpush1.bf16.msra.mxu0 %v418
        %484 = vmatprep.subr.bf16.mxu0 %v421
        %485 = vmatpush1.bf16.msra.mxu0 %v420
        %486 = vmatprep.subr.bf16.mxu0 %v423
        %487 = vmatpush1.bf16.msra.mxu0 %v422
        %488 = vmatprep.subr.bf16.mxu0 %v425
        %489 = vmatpush1.bf16.msra.mxu0 %v424
        %490 = vmatprep.subr.bf16.mxu0 %v427
        %491 = vmatpush1.bf16.msra.mxu0 %v426
        %492 = vmatprep.subr.bf16.mxu0 %v429
        %493 = vmatpush1.bf16.msra.mxu0 %v428
        %494 = vmatprep.subr.bf16.mxu0 %v431
        %495 = vmatpush1.bf16.msra.mxu0 %v430
        %496 = vmatprep.mubr.bf16.mxu0 %v259
        %497 = vmatmul.mubr.bf16.gmra.mrb[0].mxu0 %v258
        %v498 = vpop.f32.mrb[0].mxu0
        %v499 = vadd.f32 %v297, %v498
        %v500 = vpop.f32.mrb[0].mxu0
        %v501 = vadd.f32 %v301, %v500
        %v502 = vpop.f32.mrb[0].mxu0
        %v503 = vpop.f32.mrb[0].mxu0
        %504 = vdwg.mxu0
        %v505 = vmul.f32 %v499, 0.5
        %v506 = vmul.f32 %v501, 0.5
        %v507 = vmul.f32 %v499, 0.70710856
        %v508 = vmul.f32 %v501, 0.70710856
        %v509 = verf.f32.pop %v507
        %v510 = verf.f32.pop %v508
        %v511 = vadd.f32 %v509, 1.0
        %v512 = vadd.f32 %v510, 1.0
        %v513 = vmul.f32 %v505, %v511
        %v514 = vmul.f32 %v506, %v512
        %v515 = vadd.f32 %v513, %v514
        %516 = vadd.xlane.f32.xlu0 %v515
        %v517 = vpop.xlane.xlu0 %516
        %v518 = vrcp.pop 256.0
        %v519 = vmul.f32 %v517, %v518
        %v520 = vsub.f32 %v513, %v519
        %v521 = vsub.f32 %v514, %v519
        %v522 = vmul.f32 %v520, %v520
        %v523 = vmul.f32 %v521, %v521
        %v524 = vadd.f32 %v522, %v523
        %525 = vadd.xlane.f32.xlu0 %v524
        %v526 = vpop.xlane.xlu0 %525
        %v527 = vmul.f32 %v526, %v518
        %v528 = vadd.f32 %v527, 1e-12
        %v529 = vrsqrt.pop %v528
        %v530 = vmul.f32 %v520, %v529
        %v531 = vmul.f32 %v521, %v529
        %v532 = vld [vmem:[%s3] sm:$0x3]
        %v534 = vlaneseq
        %v535 = vshrl.u32 %v534, 7
        %v536 = vsub.s32 0, %v535
        %v537 = vrot.slane %v532, %v536
        %v538 = vlaneseq
        %v539 = vshrl.u32 %v538, 7
        %v540 = vsub.s32 1, %v539
        %v541 = vrot.slane %v532, %v540
        %v544 = vmul.f32 %v530, %v537
        %v545 = vmul.f32 %v531, %v541
        %v546 = vld [vmem:[%s4] sm:$0x3]
        %v548 = vlaneseq
        %v549 = vshrl.u32 %v548, 7
        %v550 = vsub.s32 0, %v549
        %v551 = vrot.slane %v546, %v550
        %v552 = vlaneseq
        %v553 = vshrl.u32 %v552, 7
        %v554 = vsub.s32 1, %v553
        %v555 = vrot.slane %v546, %v554
        %v558 = vadd.f32 %v544, %v551
        %v559 = vadd.f32 %v545, %v555
        %560 = vst [vmem:[%s255] sm:$0xff] %v558
        %561 = vst [vmem:[%s255 + $0x8] sm:$0xff] %v559
        %s562 = sand.u32 %s141, 1
        %s563 = scalar_lea.sflag [#allocation4], %s562
        %s564 = sand.u32 %s141, 1
        %s565 = smul.addr %s564, 16
        %s566 = scalar_lea.vmem [#allocation7], %s565
        // Predicated region
        $region49: #{tpu_custom_call.1} parent=39 // pred_check
          %p567 = pneg %p151
        $region50: #{tpu_custom_call.1} parent=39 // pred_check_branch
          %569 = sbr.rel (%p567) target = $region52
        $region51: #{tpu_custom_call.1} parent=39 // pred_region
          %s571 = ssub.s32 256, 256
          %572 = vsyncadd %s563, %s571
          %s573 = smul.addr %s23, 2
          %s574 = smul.addr %s573, 128
          %s575 = scalar_lea.hbm %s5, %s574
          %s577 = sshll.u32 %s566, 4
          %s578 = int_to_ptr.vmem [resolvable:$true] %s577
          %580 = dma.vmem_to_hbm [thread:$0]  %s578, 256, %s575, %s563
        $region52: #{tpu_custom_call.1} parent=39 // pred_fallthru
          _
      $region40: #{tpu_custom_call.1} parent=5 // pred_fallthru
        _
      %p581 = scmp.le.s32.totalorder 2, %s18
      // Predicated region
      $region53: #{tpu_custom_call.1} parent=5 // pred_check
        %p582 = pneg %p581
      $region54: #{tpu_custom_call.1} parent=5 // pred_check_branch
        %584 = sbr.rel (%p582) target = $region56
      $region55: #{tpu_custom_call.1} parent=5 // pred_region
        %s585 = ssub.s32 %s18, 2
        // Predicated region
        $region57: #{tpu_custom_call.1} parent=55 // pred_check
          %p586 = pneg %p157
        $region58: #{tpu_custom_call.1} parent=55 // pred_check_branch
          %588 = sbr.rel (%p586) target = $region60
        $region59: #{tpu_custom_call.1} parent=55 // pred_region
          %s589 = sand.u32 %s142, 1
          %s590 = scalar_lea.sflag [#allocation4], %s589
          %s591 = sand.u32 %s142, 1
          %s592 = smul.addr %s591, 16
          %s593 = scalar_lea.vmem [#allocation7], %s592
          %594 = dma.done %s590, 256
        $region60: #{tpu_custom_call.1} parent=55 // pred_fallthru
          _
      $region56: #{tpu_custom_call.1} parent=5 // pred_fallthru
        _
    $region6: #{tpu_custom_call.1} parent=1 // loop_footer
      %s22 = sadd.s32 1, %s18
    $region7: #{tpu_custom_call.1} parent=1 // loop_footer_branch
      %17 = sbr.rel target = $region3
    $region8: #{tpu_custom_call.1} parent=1 // loop_exit
      _
    %595 = vsyncpa [#allocation3], 1
    %s596 = scalar_lea.sflag [#allocation3], 1
    %597 = vsyncpa %s596, 1
    %598 = vsyncpa [#allocation6], 1
    %599 = vsyncpa [#allocation4], 1
    %s600 = scalar_lea.sflag [#allocation4], 1
    %601 = vsyncpa %s600, 1

</llo_original>
